<compile_context>
chip_gen: v6e
topology: v6e:2x2x1
jax: 0.10.0
libtpu: 0.0.40
codegen_flags: <defaults>
</compile_context>

<pallas_src>
import jax
import jax.numpy as jnp
from jax.experimental import pallas as pl
from jax.experimental.pallas import tpu as pltpu

_LANE = 128
_SUBLANE = 8
_OUT_PAD = 128                       # lane-dense output slab; column 0 holds the logit
_VMEM_LIMIT_BYTES = 32 * 1024 * 1024 # safe on v5e (128 MiB phys) / v6e / v7x (64 MiB phys)
_VMEM_TILE_BUDGET = 20 * 1024 * 1024 # tiling budget, leaves headroom under the limit


def _round_up(x, m):
    return (x + m - 1) // m * m


def _discriminator_kernel(x_ref,
                          w0_ref, b0_ref,
                          w1_ref, b1_ref,
                          w2_ref, b2_ref,
                          out_ref):
    """One row-tile of the fused MLP: (Linear -> LeakyReLU(0.2) [-> Dropout=id]) x2 -> Linear."""
    cdt = w0_ref.dtype  # MXU input dtype (f32 or bf16); accumulation is always f32.

    # Hoist bias reads once per tile (JAX does not CSE broadcast_in_dim).
    b0 = b0_ref[...]
    b1 = b1_ref[...]
    b2 = b2_ref[...]

    x = x_ref[...]

    # Layer 0: Linear(pacdim -> h0) + LeakyReLU(0.2)   (Dropout == identity, eval)
    h = jnp.dot(x, w0_ref[...], preferred_element_type=jnp.float32) + b0
    h = jnp.where(h > 0, h, 0.2 * h)

    # Layer 1: Linear(h0 -> h1) + LeakyReLU(0.2)       (Dropout == identity, eval)
    h = jnp.dot(h.astype(cdt), w1_ref[...], preferred_element_type=jnp.float32) + b1
    h = jnp.where(h > 0, h, 0.2 * h)

    # Final projection: w2/b2 are zero-padded to 128 output lanes so the store
    # is a full-width (unmasked) vst; column 0 carries the real logit.
    out_ref[...] = jnp.dot(h.astype(cdt), w2_ref[...],
                           preferred_element_type=jnp.float32) + b2


def _choose_tile_m(rows, k_pad, h0_pad, h1_pad, in_bytes, tile_m_max):
    """Largest row tile whose double-buffered working set fits the VMEM budget."""
    weight_bytes = 2 * (k_pad * h0_pad + h0_pad * h1_pad + h1_pad * _OUT_PAD) * in_bytes
    weight_bytes += 2 * (h0_pad + h1_pad + _OUT_PAD) * 4  # f32 biases
    # streaming x (x2 buffers) + f32 intermediates + out slab (x2 buffers)
    per_row = 2 * k_pad * in_bytes + (h0_pad + h1_pad) * 4 + 2 * _OUT_PAD * 4

    tile = _SUBLANE
    for cand in (1024, 896, 768, 640, 512, 384, 256, 128):
        if weight_bytes + cand * per_row <= _VMEM_TILE_BUDGET:
            tile = cand
            break
    tile = min(tile, max(_SUBLANE, _round_up(rows, _SUBLANE)))
    tile = min(tile, max(_SUBLANE, (tile_m_max // _SUBLANE) * _SUBLANE))
    return tile


def discriminator_forward(x, params, pac, *, compute_dtype=jnp.float32, tile_m_max=1024):
    """x: (N, input_dim), N % pac == 0. Returns (N // pac, 1) float32 logits."""
    n, input_dim = x.shape
    assert n % pac == 0, "batch size must be divisible by pac"
    rows = n // pac
    pacdim = input_dim * pac

    (w0, b0), (w1, b1), (w2, b2) = params
    h0 = w0.shape[1]
    h1 = w1.shape[1]
    assert w0.shape[0] == pacdim and w1.shape[0] == h0 and w2.shape == (h1, 1)

    # Pad feature dims to the 128-lane MXU width; zero padding keeps the math exact.
    k_pad = _round_up(pacdim, _LANE)
    h0_pad = _round_up(h0, _LANE)
    h1_pad = _round_up(h1, _LANE)

    in_bytes = jnp.dtype(compute_dtype).itemsize
    tile_m = _choose_tile_m(rows, k_pad, h0_pad, h1_pad, in_bytes, tile_m_max)
    rows_pad = _round_up(rows, tile_m)
    grid = (rows_pad // tile_m,)

    # pac-reshape glue (== input_.view(-1, self.pacdim)), then pad + cast.
    x_packed = x.reshape(rows, pacdim)
    x_p = jnp.pad(x_packed, ((0, rows_pad - rows), (0, k_pad - pacdim))).astype(compute_dtype)
    w0_p = jnp.pad(w0, ((0, k_pad - pacdim), (0, h0_pad - h0))).astype(compute_dtype)
    w1_p = jnp.pad(w1, ((0, h0_pad - h0), (0, h1_pad - h1))).astype(compute_dtype)
    w2_p = jnp.pad(w2, ((0, h1_pad - h1), (0, _OUT_PAD - 1))).astype(compute_dtype)
    b0_p = jnp.pad(b0, ((0, 0), (0, h0_pad - h0))).astype(jnp.float32)
    b1_p = jnp.pad(b1, ((0, 0), (0, h1_pad - h1))).astype(jnp.float32)
    b2_p = jnp.pad(b2, ((0, 0), (0, _OUT_PAD - 1))).astype(jnp.float32)

    x_spec = pl.BlockSpec((tile_m, k_pad), lambda i: (i, 0))
    out_spec = pl.BlockSpec((tile_m, _OUT_PAD), lambda i: (i, 0))

    def _resident(shape):
        # Constant index map: block never changes, so the operand is DMA'd once
        # and stays VMEM-resident across all grid steps.
        return pl.BlockSpec(shape, lambda i: (0, 0))

    out = pl.pallas_call(
        _discriminator_kernel,
        out_shape=jax.ShapeDtypeStruct((rows_pad, _OUT_PAD), jnp.float32),
        grid=grid,
        in_specs=[
            x_spec,
            _resident((k_pad, h0_pad)), _resident((1, h0_pad)),
            _resident((h0_pad, h1_pad)), _resident((1, h1_pad)),
            _resident((h1_pad, _OUT_PAD)), _resident((1, _OUT_PAD)),
        ],
        out_specs=out_spec,
        compiler_params=pltpu.CompilerParams(
            dimension_semantics=("parallel",),
            vmem_limit_bytes=_VMEM_LIMIT_BYTES,
        ),
    )(x_p, w0_p, b0_p, w1_p, b1_p, w2_p, b2_p)

    return out[:rows, 0:1]


def init_params(key, input_dim, discriminator_dim, pac):
    """Mimic PyTorch nn.Linear default init U(-1/sqrt(fan_in), 1/sqrt(fan_in)).

    Weights stored pre-transposed as (in_features, out_features); biases (1, out_features).
    """
    dims = [input_dim * pac] + list(discriminator_dim) + [1]
    params = []
    for i in range(len(dims) - 1):
        fan_in, fan_out = dims[i], dims[i + 1]
        key, kw, kb = jax.random.split(key, 3)
        bound = 1.0 / jnp.sqrt(fan_in)
        w = jax.random.uniform(kw, (fan_in, fan_out), jnp.float32, -bound, bound)
        b = jax.random.uniform(kb, (1, fan_out), jnp.float32, -bound, bound)
        params.append((w, b))
    return params


def reference_forward(x, params, pac, compute_dtype=jnp.float32):
    """Pure-JAX reference (same cast pattern as the kernel) for correctness checks."""
    n, input_dim = x.shape
    h = x.reshape(n // pac, input_dim * pac)
    (w0, b0), (w1, b1), (w2, b2) = params
    h = jnp.dot(h.astype(compute_dtype), w0.astype(compute_dtype),
                preferred_element_type=jnp.float32) + b0
    h = jnp.where(h > 0, h, 0.2 * h)
    h = jnp.dot(h.astype(compute_dtype), w1.astype(compute_dtype),
                preferred_element_type=jnp.float32) + b1
    h = jnp.where(h > 0, h, 0.2 * h)
    return jnp.dot(h.astype(compute_dtype), w2.astype(compute_dtype),
                   preferred_element_type=jnp.float32) + b2


if __name__ == "__main__":
    key = jax.random.PRNGKey(0)

    # --- Test 1: small shapes consistent with the module --------------------
    #   batch = 8, input_dim = 16, pac = 2  ->  pacdim = 32
    #   discriminator_dim = (32, 32)        ->  output (4, 1)
    batch, input_dim, pac = 8, 16, 2
    discriminator_dim = (32, 32)

    key, kx, kp = jax.random.split(key, 3)
    x = jax.random.normal(kx, (batch, input_dim), dtype=jnp.float32)
    params = init_params(kp, input_dim, discriminator_dim, pac)

    out_f32 = jax.block_until_ready(discriminator_forward(x, params, pac))
    ref_f32 = reference_forward(x, params, pac)
    assert out_f32.shape == (batch // pac, 1)
    assert jnp.allclose(out_f32, ref_f32, atol=1e-5, rtol=1e-5), "f32 mismatch (test 1)"

    # bf16 compute path (f32 accumulation), checked against a bf16 reference.
    out_bf16 = jax.block_until_ready(
        discriminator_forward(x, params, pac, compute_dtype=jnp.bfloat16))
    ref_bf16 = reference_forward(x, params, pac, compute_dtype=jnp.bfloat16)
    assert jnp.allclose(out_bf16, ref_bf16, atol=2e-2, rtol=2e-2), "bf16 mismatch (test 1)"

    # --- Test 2: exercise the row grid (multiple tiles) ----------------------
    #   batch = 5120, pac = 10 -> rows = 512; tile_m_max=128 -> grid of 4 tiles.
    batch2, input_dim2, pac2 = 5120, 24, 10
    discriminator_dim2 = (256, 128)
    key, kx2, kp2 = jax.random.split(key, 3)
    x2 = jax.random.normal(kx2, (batch2, input_dim2), dtype=jnp.float32)
    params2 = init_params(kp2, input_dim2, discriminator_dim2, pac2)

    out2 = jax.block_until_ready(
        discriminator_forward(x2, params2, pac2, tile_m_max=128))
    ref2 = reference_forward(x2, params2, pac2)
    assert out2.shape == (batch2 // pac2, 1)
    assert jnp.allclose(out2, ref2, atol=1e-2, rtol=1e-2), "f32 mismatch (test 2, gridded)"

    print("KERNEL_OK")
</pallas_src>

<mosaic_0001>
module attributes {stable_mosaic.version = 11 : i64} {
  func.func @_discriminator_kernel(%arg0: i32, %arg1: memref<8x128xf32, #tpu.memory_space<vmem>>, %arg2: memref<128x128xf32, #tpu.memory_space<vmem>>, %arg3: memref<1x128xf32, #tpu.memory_space<vmem>>, %arg4: memref<128x128xf32, #tpu.memory_space<vmem>>, %arg5: memref<1x128xf32, #tpu.memory_space<vmem>>, %arg6: memref<128x128xf32, #tpu.memory_space<vmem>>, %arg7: memref<1x128xf32, #tpu.memory_space<vmem>>, %arg8: memref<8x128xf32, #tpu.memory_space<vmem>>) attributes {dimension_semantics = [#tpu.dimension_semantics<parallel>], iteration_bounds = array<i64: 1>, scalar_prefetch = 0 : i64, scratch_operands = 0 : i64, tpu.core_type = #tpu.core_type<tc>, window_params = [{transform_indices = @transform_0, window_bounds = array<i64: 8, 128>}, {pipeline_mode = #tpu.pipeline_mode<synchronous>, transform_indices = @transform_1, window_bounds = array<i64: 128, 128>}, {pipeline_mode = #tpu.pipeline_mode<synchronous>, transform_indices = @transform_2, window_bounds = array<i64: 1, 128>}, {pipeline_mode = #tpu.pipeline_mode<synchronous>, transform_indices = @transform_3, window_bounds = array<i64: 128, 128>}, {pipeline_mode = #tpu.pipeline_mode<synchronous>, transform_indices = @transform_4, window_bounds = array<i64: 1, 128>}, {pipeline_mode = #tpu.pipeline_mode<synchronous>, transform_indices = @transform_5, window_bounds = array<i64: 128, 128>}, {pipeline_mode = #tpu.pipeline_mode<synchronous>, transform_indices = @transform_6, window_bounds = array<i64: 1, 128>}, {transform_indices = @transform_7, window_bounds = array<i64: 8, 128>}]} {
    %c0 = arith.constant 0 : index
    %c0_0 = arith.constant 0 : index
    %0 = vector.load %arg3[%c0, %c0_0] : memref<1x128xf32, #tpu.memory_space<vmem>>, vector<1x128xf32>
    %c0_1 = arith.constant 0 : index
    %c0_2 = arith.constant 0 : index
    %1 = vector.load %arg5[%c0_1, %c0_2] : memref<1x128xf32, #tpu.memory_space<vmem>>, vector<1x128xf32>
    %c0_3 = arith.constant 0 : index
    %c0_4 = arith.constant 0 : index
    %2 = vector.load %arg7[%c0_3, %c0_4] : memref<1x128xf32, #tpu.memory_space<vmem>>, vector<1x128xf32>
    %c0_5 = arith.constant 0 : index
    %c0_6 = arith.constant 0 : index
    %3 = vector.load %arg1[%c0_5, %c0_6] : memref<8x128xf32, #tpu.memory_space<vmem>>, vector<8x128xf32>
    %c0_7 = arith.constant 0 : index
    %c0_8 = arith.constant 0 : index
    %4 = vector.load %arg2[%c0_7, %c0_8] : memref<128x128xf32, #tpu.memory_space<vmem>>, vector<128x128xf32>
    %cst = arith.constant dense<0.000000e+00> : vector<8x128xf32>
    %5 = tpu.matmul %3, %4, %cst {dimension_numbers = #tpu.dot_dimension_numbers<[1], [0], [0], [1], [0, 0, 1, 1], [], []>} : vector<8x128xf32>, vector<128x128xf32>, vector<8x128xf32> -> vector<8x128xf32>
    %6 = vector.broadcast %0 : vector<1x128xf32> to vector<8x128xf32>
    %7 = arith.addf %5, %6 : vector<8x128xf32>
    %cst_9 = arith.constant 0.000000e+00 : f32
    %8 = vector.broadcast %cst_9 : f32 to vector<8x128xf32>
    %9 = arith.cmpf ogt, %7, %8 : vector<8x128xf32>
    %cst_10 = arith.constant 2.000000e-01 : f32
    %10 = vector.broadcast %cst_10 : f32 to vector<8x128xf32>
    %11 = arith.mulf %10, %7 : vector<8x128xf32>
    %12 = arith.select %9, %7, %11 : vector<8x128xi1>, vector<8x128xf32>
    %c0_11 = arith.constant 0 : index
    %c0_12 = arith.constant 0 : index
    %13 = vector.load %arg4[%c0_11, %c0_12] : memref<128x128xf32, #tpu.memory_space<vmem>>, vector<128x128xf32>
    %cst_13 = arith.constant dense<0.000000e+00> : vector<8x128xf32>
    %14 = tpu.matmul %12, %13, %cst_13 {dimension_numbers = #tpu.dot_dimension_numbers<[1], [0], [0], [1], [0, 0, 1, 1], [], []>} : vector<8x128xf32>, vector<128x128xf32>, vector<8x128xf32> -> vector<8x128xf32>
    %15 = vector.broadcast %1 : vector<1x128xf32> to vector<8x128xf32>
    %16 = arith.addf %14, %15 : vector<8x128xf32>
    %cst_14 = arith.constant 0.000000e+00 : f32
    %17 = vector.broadcast %cst_14 : f32 to vector<8x128xf32>
    %18 = arith.cmpf ogt, %16, %17 : vector<8x128xf32>
    %cst_15 = arith.constant 2.000000e-01 : f32
    %19 = vector.broadcast %cst_15 : f32 to vector<8x128xf32>
    %20 = arith.mulf %19, %16 : vector<8x128xf32>
    %21 = arith.select %18, %16, %20 : vector<8x128xi1>, vector<8x128xf32>
    %c0_16 = arith.constant 0 : index
    %c0_17 = arith.constant 0 : index
    %22 = vector.load %arg6[%c0_16, %c0_17] : memref<128x128xf32, #tpu.memory_space<vmem>>, vector<128x128xf32>
    %cst_18 = arith.constant dense<0.000000e+00> : vector<8x128xf32>
    %23 = tpu.matmul %21, %22, %cst_18 {dimension_numbers = #tpu.dot_dimension_numbers<[1], [0], [0], [1], [0, 0, 1, 1], [], []>} : vector<8x128xf32>, vector<128x128xf32>, vector<8x128xf32> -> vector<8x128xf32>
    %24 = vector.broadcast %2 : vector<1x128xf32> to vector<8x128xf32>
    %25 = arith.addf %23, %24 : vector<8x128xf32>
    %c0_19 = arith.constant 0 : index
    %c0_20 = arith.constant 0 : index
    %26 = vector.load %arg8[%c0_19, %c0_20] : memref<8x128xf32, #tpu.memory_space<vmem>>, vector<8x128xf32>
    tpu.vector_store %arg8[%c0_19, %c0_20], %25 {strides = array<i32>} : memref<8x128xf32, #tpu.memory_space<vmem>>, vector<8x128xf32>,
    return
  }
  func.func @transform_0(%arg0: i32) -> (i32, i32) {
    %c0_i32 = arith.constant 0 : i32
    %c0_i32_0 = arith.constant 0 : i32
    return %arg0, %c0_i32 : i32, i32
  }
  func.func @transform_1(%arg0: i32) -> (i32, i32) {
    %c0_i32 = arith.constant 0 : i32
    %c0_i32_0 = arith.constant 0 : i32
    %c0_i32_1 = arith.constant 0 : i32
    return %c0_i32, %c0_i32_0 : i32, i32
  }
  func.func @transform_2(%arg0: i32) -> (i32, i32) {
    %c0_i32 = arith.constant 0 : i32
    %c0_i32_0 = arith.constant 0 : i32
    %c0_i32_1 = arith.constant 0 : i32
    return %c0_i32, %c0_i32_0 : i32, i32
  }
  func.func @transform_3(%arg0: i32) -> (i32, i32) {
    %c0_i32 = arith.constant 0 : i32
    %c0_i32_0 = arith.constant 0 : i32
    %c0_i32_1 = arith.constant 0 : i32
    return %c0_i32, %c0_i32_0 : i32, i32
  }
  func.func @transform_4(%arg0: i32) -> (i32, i32) {
    %c0_i32 = arith.constant 0 : i32
    %c0_i32_0 = arith.constant 0 : i32
    %c0_i32_1 = arith.constant 0 : i32
    return %c0_i32, %c0_i32_0 : i32, i32
  }
  func.func @transform_5(%arg0: i32) -> (i32, i32) {
    %c0_i32 = arith.constant 0 : i32
    %c0_i32_0 = arith.constant 0 : i32
    %c0_i32_1 = arith.constant 0 : i32
    return %c0_i32, %c0_i32_0 : i32, i32
  }
  func.func @transform_6(%arg0: i32) -> (i32, i32) {
    %c0_i32 = arith.constant 0 : i32
    %c0_i32_0 = arith.constant 0 : i32
    %c0_i32_1 = arith.constant 0 : i32
    return %c0_i32, %c0_i32_0 : i32, i32
  }
  func.func @transform_7(%arg0: i32) -> (i32, i32) {
    %c0_i32 = arith.constant 0 : i32
    %c0_i32_0 = arith.constant 0 : i32
    return %arg0, %c0_i32 : i32, i32
  }
}

</mosaic_0001>

<llo_original>
// kernel: tpu_custom_call.1
$region0: #{tpu_custom_call.1}
  #allocation0 [shape = 'u32[]', space=smem, size = 0x4, offset = 0x4, fixed_abs, tag = 'smem constant byte address 0x4 - core index']
  #allocation1 [shape = 'u32[144,128]{1,0:T(1,128)}', space=vmem, size = 0x12000, scoped, tag = 'internal scratch']
  %s0 = inlined_call_operand.hbm [shape: f32[8,128], index: 0, kind: input, shape index: {}]
  %s1 = inlined_call_operand.hbm [shape: f32[128,128], index: 1, kind: input, shape index: {}]
  %s2 = inlined_call_operand.vmem [shape: f32[1,128], index: 2, kind: input, shape index: {}]
  %s3 = inlined_call_operand.hbm [shape: f32[128,128], index: 3, kind: input, shape index: {}]
  %s4 = inlined_call_operand.vmem [shape: f32[1,128], index: 4, kind: input, shape index: {}]
  %s5 = inlined_call_operand.hbm [shape: f32[128,128], index: 5, kind: input, shape index: {}]
  %s6 = inlined_call_operand.vmem [shape: f32[1,128], index: 6, kind: input, shape index: {}]
  %s7 = inlined_call_operand.hbm [shape: f32[8,128], index: 7, kind: output, shape index: {}]
  %s8 = sld [smem:[#allocation0]]
  $region54: #{tpu_custom_call.1} parent=0
    _
  %s10 = ssub.s32 1, %s8
  %s11 = scalar_select 0, %s10, %s8
  $region1: #{tpu_custom_call.1} parent=0
    #allocation2 [shape = 'u8[4096]{0}', space=vmem, size = 0x1000, scoped, tag = 'input window, operand 0, single buffered']
    #allocation3 [shape = 's32[1]{0}', space=sflag, size = 0x4, scoped, tag = 'scoped memory for tpu_custom_call.1']
    #allocation4 [shape = 's32[1]{0}', space=sflag, size = 0x4, scoped, tag = 'scoped memory for tpu_custom_call.1']
    #allocation5 [shape = 'u8[65536]{0}', space=vmem, size = 0x10000, scoped, tag = 'input window, operand 1, single buffered']
    #allocation6 [shape = 's32[1]{0}', space=sflag, size = 0x4, scoped, tag = 'scoped memory for tpu_custom_call.1']
    #allocation7 [shape = 'u8[65536]{0}', space=vmem, size = 0x10000, scoped, tag = 'input window, operand 3, single buffered']
    #allocation8 [shape = 'u8[65536]{0}', space=vmem, size = 0x10000, scoped, tag = 'input window, operand 5, single buffered']
    #allocation9 [shape = 's32[1]{0}', space=sflag, size = 0x4, scoped, tag = 'scoped memory for tpu_custom_call.1']
    #allocation10 [shape = 'u8[4096]{0}', space=vmem, size = 0x1000, scoped, tag = 'output window, operand 0, single buffered']
    %12 = vsyncpa [#allocation3], 0
    %13 = vsyncpa [#allocation6], 0
    %14 = vsyncpa [#allocation9], 0
    %15 = vsyncpa [#allocation4], 0
    // Predicated region
    $region2: #{tpu_custom_call.1} parent=1 // pred_check
      _
    $region3: #{tpu_custom_call.1} parent=1 // pred_check_branch
      %17 = sbr.rel (0) target = $region5
    $region4: #{tpu_custom_call.1} parent=1 // pred_region
      %s19 = ssub.s32 128, 128
      %20 = vsyncadd [#allocation3], %s19
      %s22 = sshll.u32 [#allocation2], 4
      %s23 = int_to_ptr.vmem [resolvable:$true] %s22
      %25 = dma.hbm_to_vmem [thread:$0]  %s0, 128, %s23, [#allocation3]
    $region5: #{tpu_custom_call.1} parent=1 // pred_fallthru
      _
    // Predicated region
    $region6: #{tpu_custom_call.1} parent=1 // pred_check
      _
    $region7: #{tpu_custom_call.1} parent=1 // pred_check_branch
      %27 = sbr.rel (0) target = $region9
    $region8: #{tpu_custom_call.1} parent=1 // pred_region
      %s29 = ssub.s32 2048, 2048
      %30 = vsyncadd [#allocation6], %s29
      %s31 = sshll.u32 [#allocation5], 4
      %s32 = int_to_ptr.vmem [resolvable:$true] %s31
      %37 = dma.hbm_to_vmem [thread:$0]  %s1, 2048, %s32, [#allocation6], 128, 128, 8
    $region9: #{tpu_custom_call.1} parent=1 // pred_fallthru
      _
    // Predicated region
    $region10: #{tpu_custom_call.1} parent=1 // pred_check
      _
    $region11: #{tpu_custom_call.1} parent=1 // pred_check_branch
      %39 = sbr.rel (0) target = $region13
    $region12: #{tpu_custom_call.1} parent=1 // pred_region
      _
    $region13: #{tpu_custom_call.1} parent=1 // pred_fallthru
      _
    // Predicated region
    $region14: #{tpu_custom_call.1} parent=1 // pred_check
      _
    $region15: #{tpu_custom_call.1} parent=1 // pred_check_branch
      %41 = sbr.rel (0) target = $region17
    $region16: #{tpu_custom_call.1} parent=1 // pred_region
      %s43 = ssub.s32 2048, 2048
      %44 = vsyncadd [#allocation6], %s43
      %s45 = sshll.u32 [#allocation7], 4
      %s46 = int_to_ptr.vmem [resolvable:$true] %s45
      %51 = dma.hbm_to_vmem [thread:$0]  %s3, 2048, %s46, [#allocation6], 128, 128, 8
    $region17: #{tpu_custom_call.1} parent=1 // pred_fallthru
      _
    // Predicated region
    $region18: #{tpu_custom_call.1} parent=1 // pred_check
      _
    $region19: #{tpu_custom_call.1} parent=1 // pred_check_branch
      %53 = sbr.rel (0) target = $region21
    $region20: #{tpu_custom_call.1} parent=1 // pred_region
      _
    $region21: #{tpu_custom_call.1} parent=1 // pred_fallthru
      _
    // Predicated region
    $region22: #{tpu_custom_call.1} parent=1 // pred_check
      _
    $region23: #{tpu_custom_call.1} parent=1 // pred_check_branch
      %55 = sbr.rel (0) target = $region25
    $region24: #{tpu_custom_call.1} parent=1 // pred_region
      %s57 = ssub.s32 2048, 2048
      %58 = vsyncadd [#allocation9], %s57
      %s59 = sshll.u32 [#allocation8], 4
      %s60 = int_to_ptr.vmem [resolvable:$true] %s59
      %65 = dma.hbm_to_vmem [thread:$0]  %s5, 2048, %s60, [#allocation9], 128, 128, 8
    $region25: #{tpu_custom_call.1} parent=1 // pred_fallthru
      _
    // Predicated region
    $region26: #{tpu_custom_call.1} parent=1 // pred_check
      _
    $region27: #{tpu_custom_call.1} parent=1 // pred_check_branch
      %67 = sbr.rel (0) target = $region29
    $region28: #{tpu_custom_call.1} parent=1 // pred_region
      _
    $region29: #{tpu_custom_call.1} parent=1 // pred_fallthru
      _
    // Predicated region
    $region30: #{tpu_custom_call.1} parent=1 // pred_check
      _
    $region31: #{tpu_custom_call.1} parent=1 // pred_check_branch
      %69 = sbr.rel (0) target = $region33
    $region32: #{tpu_custom_call.1} parent=1 // pred_region
      %70 = dma.done [#allocation3], 128
    $region33: #{tpu_custom_call.1} parent=1 // pred_fallthru
      _
    // Predicated region
    $region34: #{tpu_custom_call.1} parent=1 // pred_check
      _
    $region35: #{tpu_custom_call.1} parent=1 // pred_check_branch
      %72 = sbr.rel (0) target = $region37
    $region36: #{tpu_custom_call.1} parent=1 // pred_region
      %73 = dma.done [#allocation6], 2048
    $region37: #{tpu_custom_call.1} parent=1 // pred_fallthru
      _
    // Predicated region
    $region38: #{tpu_custom_call.1} parent=1 // pred_check
      _
    $region39: #{tpu_custom_call.1} parent=1 // pred_check_branch
      %75 = sbr.rel (0) target = $region41
    $region40: #{tpu_custom_call.1} parent=1 // pred_region
      %76 = dma.done [#allocation6], 2048
    $region41: #{tpu_custom_call.1} parent=1 // pred_fallthru
      _
    // Predicated region
    $region42: #{tpu_custom_call.1} parent=1 // pred_check
      _
    $region43: #{tpu_custom_call.1} parent=1 // pred_check_branch
      %78 = sbr.rel (0) target = $region45
    $region44: #{tpu_custom_call.1} parent=1 // pred_region
      %79 = dma.done [#allocation9], 2048
    $region45: #{tpu_custom_call.1} parent=1 // pred_fallthru
      _
    %v80 = vld [vmem:[%s2] sm:$0x1]
    %v81 = vld [vmem:[%s4] sm:$0x1]
    %v82 = vld [vmem:[%s6] sm:$0x1]
    %v83 = vld [vmem:[#allocation2] sm:$0xff]
    %v84 = vld [vmem:[#allocation5] sm:$0xff]
    %v85 = vld [vmem:[#allocation5 + $0x8] sm:$0xff]
    %v86 = vld [vmem:[#allocation5 + $0x10] sm:$0xff]
    %v87 = vld [vmem:[#allocation5 + $0x18] sm:$0xff]
    %v88 = vld [vmem:[#allocation5 + $0x20] sm:$0xff]
    %v89 = vld [vmem:[#allocation5 + $0x28] sm:$0xff]
    %v90 = vld [vmem:[#allocation5 + $0x30] sm:$0xff]
    %v91 = vld [vmem:[#allocation5 + $0x38] sm:$0xff]
    %v92 = vld [vmem:[#allocation5 + $0x40] sm:$0xff]
    %v93 = vld [vmem:[#allocation5 + $0x48] sm:$0xff]
    %v94 = vld [vmem:[#allocation5 + $0x50] sm:$0xff]
    %v95 = vld [vmem:[#allocation5 + $0x58] sm:$0xff]
    %v96 = vld [vmem:[#allocation5 + $0x60] sm:$0xff]
    %v97 = vld [vmem:[#allocation5 + $0x68] sm:$0xff]
    %v98 = vld [vmem:[#allocation5 + $0x70] sm:$0xff]
    %v99 = vld [vmem:[#allocation5 + $0x78] sm:$0xff]
    %v101 = vlaneseq
    %v102 = vshrl.u32 %v101, 7
    %v103 = vsub.s32 0, %v102
    %v104 = vrot.slane %v80, %v103
    %106 = vmatprep.subr.mxu0 0.0
    %107 = vmatpush1.msra.mxu0 %v99
    %108 = vmatprep.subr.mxu0 0.0
    %109 = vmatpush1.msra.mxu0 %v98
    %110 = vmatprep.subr.mxu0 0.0
    %111 = vmatpush1.msra.mxu0 %v97
    %112 = vmatprep.subr.mxu0 0.0
    %113 = vmatpush1.msra.mxu0 %v96
    %114 = vmatprep.subr.mxu0 0.0
    %115 = vmatpush1.msra.mxu0 %v95
    %116 = vmatprep.subr.mxu0 0.0
    %117 = vmatpush1.msra.mxu0 %v94
    %118 = vmatprep.subr.mxu0 0.0
    %119 = vmatpush1.msra.mxu0 %v93
    %120 = vmatprep.subr.mxu0 0.0
    %121 = vmatpush1.msra.mxu0 %v92
    %122 = vmatprep.subr.mxu0 0.0
    %123 = vmatpush1.msra.mxu0 %v91
    %124 = vmatprep.subr.mxu0 0.0
    %125 = vmatpush1.msra.mxu0 %v90
    %126 = vmatprep.subr.mxu0 0.0
    %127 = vmatpush1.msra.mxu0 %v89
    %128 = vmatprep.subr.mxu0 0.0
    %129 = vmatpush1.msra.mxu0 %v88
    %130 = vmatprep.subr.mxu0 0.0
    %131 = vmatpush1.msra.mxu0 %v87
    %132 = vmatprep.subr.mxu0 0.0
    %133 = vmatpush1.msra.mxu0 %v86
    %134 = vmatprep.subr.mxu0 0.0
    %135 = vmatpush1.msra.mxu0 %v85
    %136 = vmatprep.subr.mxu0 0.0
    %137 = vmatpush1.msra.mxu0 %v84
    %138 = vmatprep.subr.mxu0 0.0
    %139 = vmatpush2.msra.mxu0 0.0
    %140 = vmatprep.subr.mxu0 0.0
    %141 = vmatpush2.msra.mxu0 0.0
    %142 = vmatprep.subr.mxu0 0.0
    %143 = vmatpush2.msra.mxu0 0.0
    %144 = vmatprep.subr.mxu0 0.0
    %145 = vmatpush2.msra.mxu0 0.0
    %146 = vmatprep.subr.mxu0 0.0
    %147 = vmatpush2.msra.mxu0 0.0
    %148 = vmatprep.subr.mxu0 0.0
    %149 = vmatpush2.msra.mxu0 0.0
    %150 = vmatprep.subr.mxu0 0.0
    %151 = vmatpush2.msra.mxu0 0.0
    %152 = vmatprep.subr.mxu0 0.0
    %153 = vmatpush2.msra.mxu0 0.0
    %154 = vmatprep.subr.mxu0 0.0
    %155 = vmatpush2.msra.mxu0 0.0
    %156 = vmatprep.subr.mxu0 0.0
    %157 = vmatpush2.msra.mxu0 0.0
    %158 = vmatprep.subr.mxu0 0.0
    %159 = vmatpush2.msra.mxu0 0.0
    %160 = vmatprep.subr.mxu0 0.0
    %161 = vmatpush2.msra.mxu0 0.0
    %162 = vmatprep.subr.mxu0 0.0
    %163 = vmatpush2.msra.mxu0 0.0
    %164 = vmatprep.subr.mxu0 0.0
    %165 = vmatpush2.msra.mxu0 0.0
    %166 = vmatprep.subr.mxu0 0.0
    %167 = vmatpush2.msra.mxu0 0.0
    %168 = vmatprep.subr.mxu0 0.0
    %169 = vmatpush2.msra.mxu0 0.0
    %170 = vmatprep.mubr.f32.mxu0 0.0
    %171 = vmatmul.mubr.f32.gmra.mxu0 %v83
    %v172 = vpop.f32.mrf.mxu0
    %v173 = vadd.f32 %v104, %v172
    %v174 = vpop.f32.mrf.mxu0
    %175 = vdwg.mxu0
    %vm176 = vcmp.gt.f32.partialorder %v173, 0.0
    %v177 = vmul.f32 %v173, 0.2
    %v178 = vsel %vm176, %v173, %v177
    %v179 = vld [vmem:[#allocation7] sm:$0xff]
    %v180 = vld [vmem:[#allocation7 + $0x8] sm:$0xff]
    %v181 = vld [vmem:[#allocation7 + $0x10] sm:$0xff]
    %v182 = vld [vmem:[#allocation7 + $0x18] sm:$0xff]
    %v183 = vld [vmem:[#allocation7 + $0x20] sm:$0xff]
    %v184 = vld [vmem:[#allocation7 + $0x28] sm:$0xff]
    %v185 = vld [vmem:[#allocation7 + $0x30] sm:$0xff]
    %v186 = vld [vmem:[#allocation7 + $0x38] sm:$0xff]
    %v187 = vld [vmem:[#allocation7 + $0x40] sm:$0xff]
    %v188 = vld [vmem:[#allocation7 + $0x48] sm:$0xff]
    %v189 = vld [vmem:[#allocation7 + $0x50] sm:$0xff]
    %v190 = vld [vmem:[#allocation7 + $0x58] sm:$0xff]
    %v191 = vld [vmem:[#allocation7 + $0x60] sm:$0xff]
    %v192 = vld [vmem:[#allocation7 + $0x68] sm:$0xff]
    %v193 = vld [vmem:[#allocation7 + $0x70] sm:$0xff]
    %v194 = vld [vmem:[#allocation7 + $0x78] sm:$0xff]
    %v196 = vlaneseq
    %v197 = vshrl.u32 %v196, 7
    %v198 = vsub.s32 0, %v197
    %v199 = vrot.slane %v81, %v198
    %201 = vmatprep.subr.mxu0 0.0
    %202 = vmatpush1.msra.mxu0 %v194
    %203 = vmatprep.subr.mxu0 0.0
    %204 = vmatpush1.msra.mxu0 %v193
    %205 = vmatprep.subr.mxu0 0.0
    %206 = vmatpush1.msra.mxu0 %v192
    %207 = vmatprep.subr.mxu0 0.0
    %208 = vmatpush1.msra.mxu0 %v191
    %209 = vmatprep.subr.mxu0 0.0
    %210 = vmatpush1.msra.mxu0 %v190
    %211 = vmatprep.subr.mxu0 0.0
    %212 = vmatpush1.msra.mxu0 %v189
    %213 = vmatprep.subr.mxu0 0.0
    %214 = vmatpush1.msra.mxu0 %v188
    %215 = vmatprep.subr.mxu0 0.0
    %216 = vmatpush1.msra.mxu0 %v187
    %217 = vmatprep.subr.mxu0 0.0
    %218 = vmatpush1.msra.mxu0 %v186
    %219 = vmatprep.subr.mxu0 0.0
    %220 = vmatpush1.msra.mxu0 %v185
    %221 = vmatprep.subr.mxu0 0.0
    %222 = vmatpush1.msra.mxu0 %v184
    %223 = vmatprep.subr.mxu0 0.0
    %224 = vmatpush1.msra.mxu0 %v183
    %225 = vmatprep.subr.mxu0 0.0
    %226 = vmatpush1.msra.mxu0 %v182
    %227 = vmatprep.subr.mxu0 0.0
    %228 = vmatpush1.msra.mxu0 %v181
    %229 = vmatprep.subr.mxu0 0.0
    %230 = vmatpush1.msra.mxu0 %v180
    %231 = vmatprep.subr.mxu0 0.0
    %232 = vmatpush1.msra.mxu0 %v179
    %233 = vmatprep.subr.mxu0 0.0
    %234 = vmatpush2.msra.mxu0 0.0
    %235 = vmatprep.subr.mxu0 0.0
    %236 = vmatpush2.msra.mxu0 0.0
    %237 = vmatprep.subr.mxu0 0.0
    %238 = vmatpush2.msra.mxu0 0.0
    %239 = vmatprep.subr.mxu0 0.0
    %240 = vmatpush2.msra.mxu0 0.0
    %241 = vmatprep.subr.mxu0 0.0
    %242 = vmatpush2.msra.mxu0 0.0
    %243 = vmatprep.subr.mxu0 0.0
    %244 = vmatpush2.msra.mxu0 0.0
    %245 = vmatprep.subr.mxu0 0.0
    %246 = vmatpush2.msra.mxu0 0.0
    %247 = vmatprep.subr.mxu0 0.0
    %248 = vmatpush2.msra.mxu0 0.0
    %249 = vmatprep.subr.mxu0 0.0
    %250 = vmatpush2.msra.mxu0 0.0
    %251 = vmatprep.subr.mxu0 0.0
    %252 = vmatpush2.msra.mxu0 0.0
    %253 = vmatprep.subr.mxu0 0.0
    %254 = vmatpush2.msra.mxu0 0.0
    %255 = vmatprep.subr.mxu0 0.0
    %256 = vmatpush2.msra.mxu0 0.0
    %257 = vmatprep.subr.mxu0 0.0
    %258 = vmatpush2.msra.mxu0 0.0
    %259 = vmatprep.subr.mxu0 0.0
    %260 = vmatpush2.msra.mxu0 0.0
    %261 = vmatprep.subr.mxu0 0.0
    %262 = vmatpush2.msra.mxu0 0.0
    %263 = vmatprep.subr.mxu0 0.0
    %264 = vmatpush2.msra.mxu0 0.0
    %265 = vmatprep.mubr.f32.mxu0 0.0
    %266 = vmatmul.mubr.f32.gmra.mxu0 %v178
    %v267 = vpop.f32.mrf.mxu0
    %v268 = vadd.f32 %v199, %v267
    %v269 = vpop.f32.mrf.mxu0
    %270 = vdwg.mxu0
    %vm271 = vcmp.gt.f32.partialorder %v268, 0.0
    %v272 = vmul.f32 %v268, 0.2
    %v273 = vsel %vm271, %v268, %v272
    %v274 = vld [vmem:[#allocation8] sm:$0xff]
    %v275 = vld [vmem:[#allocation8 + $0x8] sm:$0xff]
    %v276 = vld [vmem:[#allocation8 + $0x10] sm:$0xff]
    %v277 = vld [vmem:[#allocation8 + $0x18] sm:$0xff]
    %v278 = vld [vmem:[#allocation8 + $0x20] sm:$0xff]
    %v279 = vld [vmem:[#allocation8 + $0x28] sm:$0xff]
    %v280 = vld [vmem:[#allocation8 + $0x30] sm:$0xff]
    %v281 = vld [vmem:[#allocation8 + $0x38] sm:$0xff]
    %v282 = vld [vmem:[#allocation8 + $0x40] sm:$0xff]
    %v283 = vld [vmem:[#allocation8 + $0x48] sm:$0xff]
    %v284 = vld [vmem:[#allocation8 + $0x50] sm:$0xff]
    %v285 = vld [vmem:[#allocation8 + $0x58] sm:$0xff]
    %v286 = vld [vmem:[#allocation8 + $0x60] sm:$0xff]
    %v287 = vld [vmem:[#allocation8 + $0x68] sm:$0xff]
    %v288 = vld [vmem:[#allocation8 + $0x70] sm:$0xff]
    %v289 = vld [vmem:[#allocation8 + $0x78] sm:$0xff]
    %v291 = vlaneseq
    %v292 = vshrl.u32 %v291, 7
    %v293 = vsub.s32 0, %v292
    %v294 = vrot.slane %v82, %v293
    %296 = vmatprep.subr.mxu0 0.0
    %297 = vmatpush1.msra.mxu0 %v289
    %298 = vmatprep.subr.mxu0 0.0
    %299 = vmatpush1.msra.mxu0 %v288
    %300 = vmatprep.subr.mxu0 0.0
    %301 = vmatpush1.msra.mxu0 %v287
    %302 = vmatprep.subr.mxu0 0.0
    %303 = vmatpush1.msra.mxu0 %v286
    %304 = vmatprep.subr.mxu0 0.0
    %305 = vmatpush1.msra.mxu0 %v285
    %306 = vmatprep.subr.mxu0 0.0
    %307 = vmatpush1.msra.mxu0 %v284
    %308 = vmatprep.subr.mxu0 0.0
    %309 = vmatpush1.msra.mxu0 %v283
    %310 = vmatprep.subr.mxu0 0.0
    %311 = vmatpush1.msra.mxu0 %v282
    %312 = vmatprep.subr.mxu0 0.0
    %313 = vmatpush1.msra.mxu0 %v281
    %314 = vmatprep.subr.mxu0 0.0
    %315 = vmatpush1.msra.mxu0 %v280
    %316 = vmatprep.subr.mxu0 0.0
    %317 = vmatpush1.msra.mxu0 %v279
    %318 = vmatprep.subr.mxu0 0.0
    %319 = vmatpush1.msra.mxu0 %v278
    %320 = vmatprep.subr.mxu0 0.0
    %321 = vmatpush1.msra.mxu0 %v277
    %322 = vmatprep.subr.mxu0 0.0
    %323 = vmatpush1.msra.mxu0 %v276
    %324 = vmatprep.subr.mxu0 0.0
    %325 = vmatpush1.msra.mxu0 %v275
    %326 = vmatprep.subr.mxu0 0.0
    %327 = vmatpush1.msra.mxu0 %v274
    %328 = vmatprep.subr.mxu0 0.0
    %329 = vmatpush2.msra.mxu0 0.0
    %330 = vmatprep.subr.mxu0 0.0
    %331 = vmatpush2.msra.mxu0 0.0
    %332 = vmatprep.subr.mxu0 0.0
    %333 = vmatpush2.msra.mxu0 0.0
    %334 = vmatprep.subr.mxu0 0.0
    %335 = vmatpush2.msra.mxu0 0.0
    %336 = vmatprep.subr.mxu0 0.0
    %337 = vmatpush2.msra.mxu0 0.0
    %338 = vmatprep.subr.mxu0 0.0
    %339 = vmatpush2.msra.mxu0 0.0
    %340 = vmatprep.subr.mxu0 0.0
    %341 = vmatpush2.msra.mxu0 0.0
    %342 = vmatprep.subr.mxu0 0.0
    %343 = vmatpush2.msra.mxu0 0.0
    %344 = vmatprep.subr.mxu0 0.0
    %345 = vmatpush2.msra.mxu0 0.0
    %346 = vmatprep.subr.mxu0 0.0
    %347 = vmatpush2.msra.mxu0 0.0
    %348 = vmatprep.subr.mxu0 0.0
    %349 = vmatpush2.msra.mxu0 0.0
    %350 = vmatprep.subr.mxu0 0.0
    %351 = vmatpush2.msra.mxu0 0.0
    %352 = vmatprep.subr.mxu0 0.0
    %353 = vmatpush2.msra.mxu0 0.0
    %354 = vmatprep.subr.mxu0 0.0
    %355 = vmatpush2.msra.mxu0 0.0
    %356 = vmatprep.subr.mxu0 0.0
    %357 = vmatpush2.msra.mxu0 0.0
    %358 = vmatprep.subr.mxu0 0.0
    %359 = vmatpush2.msra.mxu0 0.0
    %360 = vmatprep.mubr.f32.mxu0 0.0
    %361 = vmatmul.mubr.f32.gmra.mxu0 %v273
    %v362 = vpop.f32.mrf.mxu0
    %v363 = vadd.f32 %v294, %v362
    %v364 = vpop.f32.mrf.mxu0
    %365 = vdwg.mxu0
    %366 = vst [vmem:[#allocation10] sm:$0xff] %v363
    // Predicated region
    $region46: #{tpu_custom_call.1} parent=1 // pred_check
      _
    $region47: #{tpu_custom_call.1} parent=1 // pred_check_branch
      %368 = sbr.rel (0) target = $region49
    $region48: #{tpu_custom_call.1} parent=1 // pred_region
      %s370 = ssub.s32 128, 128
      %371 = vsyncadd [#allocation4], %s370
      %s373 = sshll.u32 [#allocation10], 4
      %s374 = int_to_ptr.vmem [resolvable:$true] %s373
      %376 = dma.vmem_to_hbm [thread:$0]  %s374, 128, %s7, [#allocation4]
    $region49: #{tpu_custom_call.1} parent=1 // pred_fallthru
      _
    // Predicated region
    $region50: #{tpu_custom_call.1} parent=1 // pred_check
      _
    $region51: #{tpu_custom_call.1} parent=1 // pred_check_branch
      %378 = sbr.rel (0) target = $region53
    $region52: #{tpu_custom_call.1} parent=1 // pred_region
      %379 = dma.done [#allocation4], 128
    $region53: #{tpu_custom_call.1} parent=1 // pred_fallthru
      _
    %380 = vsyncpa [#allocation3], 1
    %381 = vsyncpa [#allocation6], 1
    %382 = vsyncpa [#allocation9], 1
    %383 = vsyncpa [#allocation4], 1

</llo_original>
